<compile_context>
chip_gen: v7x
topology: tpu7x:2x2x1
jax: 0.10.0
libtpu: 0.0.40
codegen_flags: <defaults>
</compile_context>

<pallas_src>
import functools

import jax
import jax.numpy as jnp
from jax import lax
from jax.experimental import pallas as pl
from jax.experimental.pallas import tpu as pltpu

_LANE = 128


def _round_up(n, m):
    return ((n + m - 1) // m) * m


def _mlp_kernel(x_ref, w2_ref, sp_ref, o_ref, *, chunk):
    # Loop-invariant parameter loads (hoisted out of the chunk loop).
    sp = sp_ref[...]                      # (16, 8) packed small params
    w1c0 = sp[:, 0:1]                     # (16, 1)  w1[:, 0]
    w1c1 = sp[:, 1:2]                     # (16, 1)  w1[:, 1]
    b1c = sp[:, 2:3]                      # (16, 1)
    b2c = sp[:, 3:4]                      # (16, 1)
    w3c = sp[:, 4:5]                      # (16, 1)  w3 as a column
    b3 = sp[0:1, 5:6]                     # (1, 1)
    w2 = w2_ref[...]                      # (16, 16)

    n_chunks = x_ref.shape[1] // chunk    # static

    def body(c, carry):
        off = pl.multiple_of(c * chunk, chunk)
        xc = x_ref[:, pl.ds(off, chunk)]                       # (2, chunk)
        x0 = xc[0:1, :]
        x1 = xc[1:2, :]

        # layer 1 (K=2): pure VPU broadcast MACs, off the MXU.
        h1 = jnp.maximum(w1c0 * x0 + w1c1 * x1 + b1c, 0.0)     # (16, chunk)

        # layer 2 (16x16): MXU.
        h2 = jnp.dot(w2, h1, preferred_element_type=jnp.float32) + b2c
        h2 = jnp.maximum(h2, 0.0)                              # (16, chunk)

        # layer 3 (M=1): VPU multiply + XLU sublane reduce.
        out = jnp.sum(w3c * h2, axis=0, keepdims=True) + b3    # (1, chunk)

        o_ref[:, pl.ds(off, chunk)] = out.astype(o_ref.dtype)
        return carry

    lax.fori_loop(0, n_chunks, body, 0, unroll=n_chunks <= 8)


def _pack_small_params(params):
    """Pack w1, b1, b2, w3, b3 into one (16, 8) f32 block (fewer input DMAs)."""
    sp = jnp.zeros((16, 8), jnp.float32)
    sp = sp.at[:, 0:2].set(params["w1"].astype(jnp.float32))      # (16, 2)
    sp = sp.at[:, 2].set(params["b1"].astype(jnp.float32))        # (16,)
    sp = sp.at[:, 3].set(params["b2"].astype(jnp.float32))        # (16,)
    sp = sp.at[:, 4].set(params["w3"].reshape(16).astype(jnp.float32))
    sp = sp.at[0, 5].set(params["b3"].reshape(()).astype(jnp.float32))
    return sp


def mlp_forward_cols(x_cols, params, *, block_b=32768, chunk=1024):
    """Fused MLP forward in batch-on-lanes layout.

    x_cols: (2, B) float32 (preferred calling contract — avoids an extra HBM
    transpose pass).  Returns (1, B) float32.
    """
    assert x_cols.shape[0] == 2, x_cols.shape
    B = x_cols.shape[1]

    # Pad the batch only to a lane multiple; let Pallas mask the ragged block.
    b_pad = _round_up(B, _LANE)
    # Defensive rounding so the lane-dim BlockSpec constraint always holds.
    tb = min(_round_up(max(block_b, _LANE), _LANE), b_pad)
    ck = min(_round_up(max(chunk, _LANE), _LANE), tb)
    tb = (tb // ck) * ck                  # tb is a multiple of ck, >= ck >= 128
    grid = pl.cdiv(b_pad, tb)

    x_p = x_cols.astype(jnp.float32)
    if b_pad != B:
        x_p = jnp.pad(x_p, ((0, 0), (0, b_pad - B)))

    w2 = params["w2"].astype(jnp.float32)
    sp = _pack_small_params(params)

    out = pl.pallas_call(
        functools.partial(_mlp_kernel, chunk=ck),
        out_shape=jax.ShapeDtypeStruct((1, b_pad), jnp.float32),
        grid=(grid,),
        in_specs=[
            pl.BlockSpec((2, tb), lambda i: (0, i)),       # x, tiled over batch
            pl.BlockSpec(w2.shape, lambda i: (0, 0)),      # resident weights
            pl.BlockSpec(sp.shape, lambda i: (0, 0)),      # resident small params
        ],
        out_specs=pl.BlockSpec((1, tb), lambda i: (0, i)),  # lane-dense store
        compiler_params=pltpu.CompilerParams(
            dimension_semantics=("parallel",)),             # megacore split on v7x
    )(x_p, w2, sp)

    return out[:, :B]


def mlp_forward(x, params, **kw):
    """PyTorch-layout entry point: x (B, 2) -> (B, 1).

    Note: the transpose here is an extra HBM pass; performance-sensitive
    callers should hand (2, B) data to mlp_forward_cols directly.
    """
    return mlp_forward_cols(x.T, params, **kw).T


def init_params(key):
    """Deterministic init mimicking nn.Linear default (uniform +/- 1/sqrt(fan_in)).

    Weights stored PyTorch-style as (out_features, in_features); biases (out,)."""
    dims = [(2, 16), (16, 16), (16, 1)]
    params = {}
    for idx, (fan_in, fan_out) in enumerate(dims, start=1):
        key, kw, kb = jax.random.split(key, 3)
        bound = 1.0 / (fan_in ** 0.5)
        params[f"w{idx}"] = jax.random.uniform(
            kw, (fan_out, fan_in), jnp.float32, minval=-bound, maxval=bound)
        params[f"b{idx}"] = jax.random.uniform(
            kb, (fan_out,), jnp.float32, minval=-bound, maxval=bound)
    return params


def mlp_reference(x, params):
    """Pure-JAX reference (PyTorch semantics: y = x @ W.T + b)."""
    h = jnp.maximum(x @ params["w1"].T + params["b1"], 0.0)
    h = jnp.maximum(h @ params["w2"].T + params["b2"], 0.0)
    return h @ params["w3"].T + params["b3"]


if __name__ == "__main__":
    key = jax.random.PRNGKey(0)
    key, kx = jax.random.split(key)

    B = 8
    x = jax.random.normal(kx, (B, 2), jnp.float32)
    params = init_params(key)

    out = mlp_forward(x, params)
    out = jax.block_until_ready(out)

    ref = mlp_reference(x, params)
    assert out.shape == (B, 1), out.shape
    assert jnp.allclose(out, ref, atol=1e-5, rtol=1e-5), (out, ref)

    print("KERNEL_OK")
</pallas_src>

<mosaic_0001>
module attributes {stable_mosaic.version = 11 : i64} {
  func.func @_mlp_kernel(%arg0: i32, %arg1: memref<2x128xf32, #tpu.memory_space<vmem>>, %arg2: memref<16x16xf32, #tpu.memory_space<vmem>>, %arg3: memref<16x8xf32, #tpu.memory_space<vmem>>, %arg4: memref<1x128xf32, #tpu.memory_space<vmem>>) attributes {dimension_semantics = [#tpu.dimension_semantics<parallel>], iteration_bounds = array<i64: 1>, scalar_prefetch = 0 : i64, scratch_operands = 0 : i64, tpu.core_type = #tpu.core_type<tc>, window_params = [{transform_indices = @transform_0, window_bounds = array<i64: 2, 128>}, {pipeline_mode = #tpu.pipeline_mode<synchronous>, transform_indices = @transform_1, window_bounds = array<i64: 16, 16>}, {pipeline_mode = #tpu.pipeline_mode<synchronous>, transform_indices = @transform_2, window_bounds = array<i64: 16, 8>}, {transform_indices = @transform_3, window_bounds = array<i64: 1, 128>}]} {
    %c0 = arith.constant 0 : index
    %c0_0 = arith.constant 0 : index
    %0 = vector.load %arg3[%c0, %c0_0] : memref<16x8xf32, #tpu.memory_space<vmem>>, vector<16x8xf32>
    %1 = vector.extract_strided_slice %0 {offsets = [0, 0], sizes = [16, 1], strides = [1, 1]} : vector<16x8xf32> to vector<16x1xf32>
    %2 = vector.extract_strided_slice %0 {offsets = [0, 1], sizes = [16, 1], strides = [1, 1]} : vector<16x8xf32> to vector<16x1xf32>
    %3 = vector.extract_strided_slice %0 {offsets = [0, 2], sizes = [16, 1], strides = [1, 1]} : vector<16x8xf32> to vector<16x1xf32>
    %4 = vector.extract_strided_slice %0 {offsets = [0, 3], sizes = [16, 1], strides = [1, 1]} : vector<16x8xf32> to vector<16x1xf32>
    %5 = vector.extract_strided_slice %0 {offsets = [0, 4], sizes = [16, 1], strides = [1, 1]} : vector<16x8xf32> to vector<16x1xf32>
    %6 = vector.extract_strided_slice %0 {offsets = [0, 5], sizes = [1, 1], strides = [1, 1]} : vector<16x8xf32> to vector<1x1xf32>
    %c0_1 = arith.constant 0 : index
    %c0_2 = arith.constant 0 : index
    %7 = vector.load %arg2[%c0_1, %c0_2] : memref<16x16xf32, #tpu.memory_space<vmem>>, vector<16x16xf32>
    %c0_i32 = arith.constant 0 : i32
    %c128_i32 = arith.constant 128 : i32
    %8 = arith.muli %c0_i32, %c128_i32 : i32
    %9 = tpu.assume_multiple %8, 128 : i32
    %c0_3 = arith.constant 0 : index
    %10 = arith.index_cast %9 : i32 to index
    %11 = vector.load %arg1[%c0_3, %10] : memref<2x128xf32, #tpu.memory_space<vmem>>, vector<2x128xf32>
    %12 = vector.extract_strided_slice %11 {offsets = [0, 0], sizes = [1, 128], strides = [1, 1]} : vector<2x128xf32> to vector<1x128xf32>
    %13 = vector.extract_strided_slice %11 {offsets = [1, 0], sizes = [1, 128], strides = [1, 1]} : vector<2x128xf32> to vector<1x128xf32>
    %14 = vector.broadcast %1 : vector<16x1xf32> to vector<16x128xf32>
    %15 = vector.broadcast %12 : vector<1x128xf32> to vector<16x128xf32>
    %16 = arith.mulf %14, %15 : vector<16x128xf32>
    %17 = vector.broadcast %2 : vector<16x1xf32> to vector<16x128xf32>
    %18 = vector.broadcast %13 : vector<1x128xf32> to vector<16x128xf32>
    %19 = arith.mulf %17, %18 : vector<16x128xf32>
    %20 = arith.addf %16, %19 : vector<16x128xf32>
    %21 = vector.broadcast %3 : vector<16x1xf32> to vector<16x128xf32>
    %22 = arith.addf %20, %21 : vector<16x128xf32>
    %cst = arith.constant 0.000000e+00 : f32
    %23 = vector.broadcast %cst : f32 to vector<16x128xf32>
    %24 = arith.maximumf %22, %23 : vector<16x128xf32>
    %cst_4 = arith.constant dense<0.000000e+00> : vector<16x128xf32>
    %25 = tpu.matmul %7, %24, %cst_4 {dimension_numbers = #tpu.dot_dimension_numbers<[1], [0], [0], [1], [0, 0, 1, 1], [], []>} : vector<16x16xf32>, vector<16x128xf32>, vector<16x128xf32> -> vector<16x128xf32>
    %26 = vector.broadcast %4 : vector<16x1xf32> to vector<16x128xf32>
    %27 = arith.addf %25, %26 : vector<16x128xf32>
    %cst_5 = arith.constant 0.000000e+00 : f32
    %28 = vector.broadcast %cst_5 : f32 to vector<16x128xf32>
    %29 = arith.maximumf %27, %28 : vector<16x128xf32>
    %30 = vector.broadcast %5 : vector<16x1xf32> to vector<16x128xf32>
    %31 = arith.mulf %30, %29 : vector<16x128xf32>
    %cst_6 = arith.constant dense<0.000000e+00> : vector<128xf32>
    %32 = vector.multi_reduction <add>, %31, %cst_6 [0] : vector<16x128xf32> to vector<128xf32>
    %33 = vector.shape_cast %32 : vector<128xf32> to vector<1x128xf32>
    %34 = vector.broadcast %6 : vector<1x1xf32> to vector<1x128xf32>
    %35 = arith.addf %33, %34 : vector<1x128xf32>
    %c0_7 = arith.constant 0 : index
    %36 = arith.index_cast %9 : i32 to index
    %37 = vector.load %arg4[%c0_7, %36] : memref<1x128xf32, #tpu.memory_space<vmem>>, vector<1x128xf32>
    tpu.vector_store %arg4[%c0_7, %36], %35 {strides = array<i32>} : memref<1x128xf32, #tpu.memory_space<vmem>>, vector<1x128xf32>,
    %c1_i32 = arith.constant 1 : i32
    return
  }
  func.func @transform_0(%arg0: i32) -> (i32, i32) {
    %c0_i32 = arith.constant 0 : i32
    %c0_i32_0 = arith.constant 0 : i32
    return %c0_i32, %arg0 : i32, i32
  }
  func.func @transform_1(%arg0: i32) -> (i32, i32) {
    %c0_i32 = arith.constant 0 : i32
    %c0_i32_0 = arith.constant 0 : i32
    %c0_i32_1 = arith.constant 0 : i32
    return %c0_i32, %c0_i32_0 : i32, i32
  }
  func.func @transform_2(%arg0: i32) -> (i32, i32) {
    %c0_i32 = arith.constant 0 : i32
    %c0_i32_0 = arith.constant 0 : i32
    %c0_i32_1 = arith.constant 0 : i32
    return %c0_i32, %c0_i32_0 : i32, i32
  }
  func.func @transform_3(%arg0: i32) -> (i32, i32) {
    %c0_i32 = arith.constant 0 : i32
    %c0_i32_0 = arith.constant 0 : i32
    return %c0_i32, %arg0 : i32, i32
  }
}

</mosaic_0001>

<llo_original>
// kernel: tpu_custom_call.1
$region0: #{tpu_custom_call.1}
  #allocation0 [shape = 'u32[]', space=smem, size = 0x4, offset = 0x4, fixed_abs, tag = 'smem constant byte address 0x4 - core index']
  #allocation1 [shape = 'u32[144,128]{1,0:T(1,128)}', space=vmem, size = 0x12000, scoped, tag = 'internal scratch']
  %s0 = inlined_call_operand.vmem [shape: f32[2,128], index: 0, kind: input, shape index: {}]
  %s1 = inlined_call_operand.vmem [shape: f32[16,16], index: 1, kind: input, shape index: {}]
  %s2 = inlined_call_operand.vmem [shape: f32[16,8], index: 2, kind: input, shape index: {}]
  %s3 = inlined_call_operand.hbm [shape: f32[1,128], index: 3, kind: output, shape index: {}]
  %s4 = sld [smem:[#allocation0]]
  $region22: #{tpu_custom_call.1} parent=0
    _
  %s6 = ssub.s32 1, %s4
  %s7 = scalar_select 0, %s6, %s4
  $region1: #{tpu_custom_call.1} parent=0
    #allocation2 [shape = 'u8[512]{0}', space=vmem, size = 0x400, scoped, tag = 'output window, operand 0, single buffered']
    #allocation3 [shape = 's32[1]{0}', space=sflag, size = 0x4, scoped, tag = 'scoped memory for tpu_custom_call.1']
    %8 = vsyncpa [#allocation3], 0
    // Predicated region
    $region2: #{tpu_custom_call.1} parent=1 // pred_check
      _
    $region3: #{tpu_custom_call.1} parent=1 // pred_check_branch
      %10 = sbr.rel (0) target = $region5
    $region4: #{tpu_custom_call.1} parent=1 // pred_region
      _
    $region5: #{tpu_custom_call.1} parent=1 // pred_fallthru
      _
    // Predicated region
    $region6: #{tpu_custom_call.1} parent=1 // pred_check
      _
    $region7: #{tpu_custom_call.1} parent=1 // pred_check_branch
      %12 = sbr.rel (0) target = $region9
    $region8: #{tpu_custom_call.1} parent=1 // pred_region
      _
    $region9: #{tpu_custom_call.1} parent=1 // pred_fallthru
      _
    // Predicated region
    $region10: #{tpu_custom_call.1} parent=1 // pred_check
      _
    $region11: #{tpu_custom_call.1} parent=1 // pred_check_branch
      %14 = sbr.rel (0) target = $region13
    $region12: #{tpu_custom_call.1} parent=1 // pred_region
      _
    $region13: #{tpu_custom_call.1} parent=1 // pred_fallthru
      _
    %v15 = vld [vmem:[%s2] sm:$0xff]
    %v16 = vld [vmem:[%s2 + $0x8] sm:$0xff]
    %v17 = vld [vmem:[%s1] sm:$0xff]
    %v18 = vld [vmem:[%s1 + $0x8] sm:$0xff]
    %v19 = vld [vmem:[%s0] sm:$0x3]
    %21 = vset.pattern.permute.xlu0 0
    %22 = vperm.xlu0 %21, %v15
    %v23 = vpop.permute.xlu0 %22
    %26 = vset.pattern.permute.xlu0 0
    %27 = vperm.xlu0 %26, %v16
    %v28 = vpop.permute.xlu0 %27
    %v30 = vlaneseq
    %v31 = vshrl.u32 %v30, 7
    %v32 = vsub.s32 0, %v31
    %v33 = vrot.slane %v19, %v32
    %v34 = vmul.f32 %v23, %v33
    %v35 = vmul.f32 %v28, %v33
    %36 = vset.pattern.permute.xlu0 1
    %37 = vperm.xlu0 %36, %v15
    %v38 = vpop.permute.xlu0 %37
    %40 = vset.pattern.permute.xlu0 1
    %41 = vperm.xlu0 %40, %v16
    %v42 = vpop.permute.xlu0 %41
    %v44 = vlaneseq
    %v45 = vshrl.u32 %v44, 7
    %v46 = vsub.s32 1, %v45
    %v47 = vrot.slane %v19, %v46
    %v48 = vmul.f32 %v38, %v47
    %v49 = vmul.f32 %v42, %v47
    %v50 = vadd.f32 %v34, %v48
    %v51 = vadd.f32 %v35, %v49
    %52 = vset.pattern.permute.xlu0 2
    %53 = vperm.xlu0 %52, %v15
    %v54 = vpop.permute.xlu0 %53
    %56 = vset.pattern.permute.xlu0 2
    %57 = vperm.xlu0 %56, %v16
    %v58 = vpop.permute.xlu0 %57
    %v60 = vadd.f32 %v50, %v54
    %v61 = vadd.f32 %v51, %v58
    %v62 = vmax.f32 %v60, 0.0
    %v63 = vmax.f32 %v61, 0.0
    %64 = vset.pattern.permute.xlu0 3
    %65 = vperm.xlu0 %64, %v15
    %v66 = vpop.permute.xlu0 %65
    %68 = vset.pattern.permute.xlu0 3
    %69 = vperm.xlu0 %68, %v16
    %v70 = vpop.permute.xlu0 %69
    %vm72 = vcmask 130048
    %v74 = vsel %vm72, %v17, 0
    %v77 = vsel %vm72, %v18, 0
    %79 = vmatprep.subr.mxu0 0.0
    %80 = vmatpush1.msra.mxu0 %v62
    %81 = vmatprep.subr.mxu0 0.0
    %82 = vmatpush1.msra.mxu0 %v63
    %83 = vmatprep.subr.mxu0 0.0
    %84 = vmatpush1.msra.mxu0 0.0
    %85 = vmatprep.subr.mxu0 0.0
    %86 = vmatpush1.msra.mxu0 0.0
    %87 = vmatprep.subr.mxu0 0.0
    %88 = vmatpush1.msra.mxu0 0.0
    %89 = vmatprep.subr.mxu0 0.0
    %90 = vmatpush1.msra.mxu0 0.0
    %91 = vmatprep.subr.mxu0 0.0
    %92 = vmatpush1.msra.mxu0 0.0
    %93 = vmatprep.subr.mxu0 0.0
    %94 = vmatpush1.msra.mxu0 0.0
    %95 = vmatprep.subr.mxu0 0.0
    %96 = vmatpush1.msra.mxu0 0.0
    %97 = vmatprep.subr.mxu0 0.0
    %98 = vmatpush1.msra.mxu0 0.0
    %99 = vmatprep.subr.mxu0 0.0
    %100 = vmatpush1.msra.mxu0 0.0
    %101 = vmatprep.subr.mxu0 0.0
    %102 = vmatpush1.msra.mxu0 0.0
    %103 = vmatprep.subr.mxu0 0.0
    %104 = vmatpush1.msra.mxu0 0.0
    %105 = vmatprep.subr.mxu0 0.0
    %106 = vmatpush1.msra.mxu0 0.0
    %107 = vmatprep.subr.mxu0 0.0
    %108 = vmatpush1.msra.mxu0 0.0
    %109 = vmatprep.subr.mxu0 0.0
    %110 = vmatpush1.msra.mxu0 0.0
    %111 = vmatprep.subr.mxu0 0.0
    %112 = vmatpush1.msra.mxu0 0.0
    %113 = vmatprep.subr.mxu0 0.0
    %114 = vmatpush1.msra.mxu0 0.0
    %115 = vmatprep.subr.mxu0 0.0
    %116 = vmatpush1.msra.mxu0 0.0
    %117 = vmatprep.subr.mxu0 0.0
    %118 = vmatpush1.msra.mxu0 0.0
    %119 = vmatprep.subr.mxu0 0.0
    %120 = vmatpush1.msra.mxu0 0.0
    %121 = vmatprep.subr.mxu0 0.0
    %122 = vmatpush1.msra.mxu0 0.0
    %123 = vmatprep.subr.mxu0 0.0
    %124 = vmatpush1.msra.mxu0 0.0
    %125 = vmatprep.subr.mxu0 0.0
    %126 = vmatpush1.msra.mxu0 0.0
    %127 = vmatprep.subr.mxu0 0.0
    %128 = vmatpush1.msra.mxu0 0.0
    %129 = vmatprep.subr.mxu0 0.0
    %130 = vmatpush1.msra.mxu0 0.0
    %131 = vmatprep.subr.mxu0 0.0
    %132 = vmatpush1.msra.mxu0 0.0
    %133 = vmatprep.subr.mxu0 0.0
    %134 = vmatpush1.msra.mxu0 0.0
    %135 = vmatprep.subr.mxu0 0.0
    %136 = vmatpush1.msra.mxu0 0.0
    %137 = vmatprep.subr.mxu0 0.0
    %138 = vmatpush1.msra.mxu0 0.0
    %139 = vmatprep.subr.mxu0 0.0
    %140 = vmatpush1.msra.mxu0 0.0
    %141 = vmatprep.subr.mxu0 0.0
    %142 = vmatpush1.msra.mxu0 0.0
    %143 = vmatprep.mubr.f32.mxu0 0.0
    %144 = vmatmul.mubr.f32.gmra.mrb[0].mxu0 %v74
    %v145 = vpop.f32.mrb[0].mxu0
    %v146 = vadd.f32 %v66, %v145
    %v147 = vpop.f32.mrb[0].mxu0
    %148 = vmatprep.mubr.f32.mxu0 0.0
    %149 = vmatmul.mubr.f32.gmra.mrb[0].mxu0 %v77
    %v150 = vpop.f32.mrb[0].mxu0
    %v151 = vadd.f32 %v70, %v150
    %v152 = vpop.f32.mrb[0].mxu0
    %153 = vdwg.mxu0
    %v154 = vmax.f32 %v146, 0.0
    %v155 = vmax.f32 %v151, 0.0
    %156 = vset.pattern.permute.xlu0 4
    %157 = vperm.xlu0 %156, %v15
    %v158 = vpop.permute.xlu0 %157
    %160 = vset.pattern.permute.xlu0 4
    %161 = vperm.xlu0 %160, %v16
    %v162 = vpop.permute.xlu0 %161
    %v164 = vmul.f32 %v158, %v154
    %v165 = vmul.f32 %v162, %v155
    %v166 = vadd.f32 %v164, %v165
    %v167 = vrot.slane %v166, 4
    %v168 = vadd.f32 %v166, %v167
    %v169 = vrot.slane %v168, 2
    %v170 = vadd.f32 %v168, %v169
    %v171 = vrot.slane %v170, 1
    %v172 = vadd.f32 %v170, %v171
    %173 = vset.pattern.permute.xlu0 5
    %174 = vperm.xlu0 %173, %v15
    %v175 = vpop.permute.xlu0 %174
    %v177 = vadd.f32 %v172, %v175
    %178 = vst [vmem:[#allocation2] sm:$0x1] %v177
    // Predicated region
    $region14: #{tpu_custom_call.1} parent=1 // pred_check
      _
    $region15: #{tpu_custom_call.1} parent=1 // pred_check_branch
      %180 = sbr.rel (0) target = $region17
    $region16: #{tpu_custom_call.1} parent=1 // pred_region
      %s182 = ssub.s32 16, 16
      %183 = vsyncadd [#allocation3], %s182
      %s185 = sshll.u32 [#allocation2], 4
      %s186 = int_to_ptr.vmem [resolvable:$true] %s185
      %188 = dma.vmem_to_hbm [thread:$0]  %s186, 16, %s3, [#allocation3]
    $region17: #{tpu_custom_call.1} parent=1 // pred_fallthru
      _
    // Predicated region
    $region18: #{tpu_custom_call.1} parent=1 // pred_check
      _
    $region19: #{tpu_custom_call.1} parent=1 // pred_check_branch
      %190 = sbr.rel (0) target = $region21
    $region20: #{tpu_custom_call.1} parent=1 // pred_region
      %191 = dma.done [#allocation3], 16
    $region21: #{tpu_custom_call.1} parent=1 // pred_fallthru
      _
    %192 = vsyncpa [#allocation3], 1

</llo_original>
